<compile_context>
chip_gen: v7x
topology: tpu7x:2x2x1
jax: 0.10.0
libtpu: 0.0.40
codegen_flags: <defaults>
</compile_context>

<pallas_src>
import functools
import math

import jax
import jax.numpy as jnp
from jax.experimental import pallas as pl
from jax.experimental.pallas import tpu as pltpu

LOG_STD_MIN = -20.0
LOG_STD_MAX = 2.0
MIN_PROB = 1e-12
LOG2 = math.log(2.0)
HALF_LOG_2PI = 0.5 * math.log(2.0 * math.pi)

LANE = 128


def _round_up(x, m):
    return (x + m - 1) // m * m


def actor_kernel(obs_ref, w1_ref, w2_ref, wh_ref, b_ref, noise_ref, out_ref,
                 *, act_limit, c_dim, h1, h2, off_b2, off_bh, off_ls, off_lg):
    obs = obs_ref[...]

    # lane-aligned static slices of the packed bias slab (all offsets are 128-multiples)
    b1 = b_ref[:, 0:h1]
    b2 = b_ref[:, off_b2:off_b2 + h2]
    bh = b_ref[:, off_bh:off_bh + wh_ref.shape[1]]

    # --- MLP trunk: Linear+ReLU, Linear+ReLU (output_activation == activation) ---
    h = jnp.dot(obs, w1_ref[...], preferred_element_type=jnp.float32) + b1
    h = jnp.maximum(h, 0.0)
    h = jnp.dot(h, w2_ref[...], preferred_element_type=jnp.float32) + b2
    h = jnp.maximum(h, 0.0)

    # --- fused heads: one MXU pass, sections at lane-aligned offsets ---
    heads = jnp.dot(h, wh_ref[...], preferred_element_type=jnp.float32) + bh
    mu = heads[:, 0:c_dim]
    log_std = jnp.clip(heads[:, off_ls:off_ls + c_dim], LOG_STD_MIN, LOG_STD_MAX)
    std = jnp.exp(log_std)
    logit = heads[:, off_lg:off_lg + 1]

    # numerically stable sigmoid (no inf intermediate)
    e = jnp.exp(-jnp.abs(logit))
    inv = 1.0 / (1.0 + e)
    p = jnp.where(logit >= 0.0, inv, e * inv)

    # --- sampling: a = mu + std*eps (rsample); eps==0, r==0.5 <=> deterministic ---
    eps = noise_ref[:, 0:c_dim]
    r = noise_ref[:, c_dim:c_dim + 1]
    a = mu + std * eps
    disc = r < p

    # --- log-prob: Normal log-pdf (z == eps by construction) fused with the
    #     tanh-squash correction 2*(log2 - a - softplus(-2a)) in ONE reduction ---
    m2a = -2.0 * a
    softplus_m2a = jnp.where(m2a > 20.0, m2a,
                             jnp.log1p(jnp.exp(jnp.minimum(m2a, 20.0))))
    per_dim = (-log_std - 0.5 * eps * eps - HALF_LOG_2PI
               - 2.0 * (LOG2 - a - softplus_m2a))
    logp_c = jnp.sum(per_dim, axis=-1, keepdims=True)

    logp_d = jnp.where(disc,
                       jnp.log(jnp.maximum(p, MIN_PROB)),
                       jnp.log(jnp.maximum(1.0 - p, MIN_PROB)))
    logp = logp_c + logp_d

    # --- single packed output slab: [act_limit*tanh(a) | disc | logp] ---
    out_ref[:, 0:c_dim] = act_limit * jnp.tanh(a)
    out_ref[:, c_dim:c_dim + 1] = disc.astype(jnp.float32)
    out_ref[:, c_dim + 1:c_dim + 2] = logp


def pack_params(params):
    """Pack head weights at lane-aligned column offsets and all biases into one slab."""
    h1 = params["w1"].shape[1]
    h2 = params["w2"].shape[1]
    c = params["w_mu"].shape[1]

    sec = _round_up(c, LANE)          # per-head lane-aligned section width
    off_ls = sec                      # log_std section start
    off_lg = 2 * sec                  # logit section start
    nheads_pad = 2 * sec + LANE       # logit section padded to one lane group

    w_heads = jnp.zeros((h2, nheads_pad), jnp.float32)
    w_heads = w_heads.at[:, 0:c].set(params["w_mu"])
    w_heads = w_heads.at[:, off_ls:off_ls + c].set(params["w_ls"])
    w_heads = w_heads.at[:, off_lg:off_lg + 1].set(params["w_lg"])

    off_b2 = _round_up(h1, LANE)
    off_bh = off_b2 + _round_up(h2, LANE)
    bias_pad = off_bh + nheads_pad
    b = jnp.zeros((1, bias_pad), jnp.float32)
    b = b.at[:, 0:h1].set(params["b1"])
    b = b.at[:, off_b2:off_b2 + h2].set(params["b2"])
    b = b.at[:, off_bh:off_bh + c].set(params["b_mu"])
    b = b.at[:, off_bh + off_ls:off_bh + off_ls + c].set(params["b_ls"])
    b = b.at[:, off_bh + off_lg:off_bh + off_lg + 1].set(params["b_lg"])

    return dict(w1=params["w1"], w2=params["w2"], w_heads=w_heads, b_packed=b,
                c=c, h1=h1, h2=h2, off_b2=off_b2, off_bh=off_bh,
                off_ls=off_ls, off_lg=off_lg, nheads_pad=nheads_pad)


def sample_noise(key, batch, c_dim, deterministic):
    # TODO(synk): could be moved in-kernel with pltpu.prng_seed/prng_random_bits to
    # drop the noise input DMA; kept as jax.random for reproducible, distribution-identical draws.
    if deterministic:
        return (jnp.zeros((batch, c_dim), jnp.float32),
                jnp.full((batch, 1), 0.5, jnp.float32))
    k_eps, k_r = jax.random.split(key)
    return (jax.random.normal(k_eps, (batch, c_dim), jnp.float32),
            jax.random.uniform(k_r, (batch, 1), jnp.float32))


def actor_forward(obs, packed, act_limit, eps, r, with_logprob=True, row_tile=1024):
    B, obs_dim = obs.shape
    c, h1, h2 = packed["c"], packed["h1"], packed["h2"]
    nheads_pad = packed["nheads_pad"]
    bias_pad = packed["b_packed"].shape[1]

    # fuse eps and r into one (B, C+1) input
    noise = jnp.concatenate([eps.astype(jnp.float32), r.astype(jnp.float32)], axis=-1)

    # batch row tile: multiple of 8 sublanes; pad batch so the grid divides evenly
    tb = min(row_tile, _round_up(B, 8))
    b_pad = _round_up(B, tb)
    if b_pad != B:
        obs = jnp.pad(obs, ((0, b_pad - B), (0, 0)))
        noise = jnp.pad(noise, ((0, b_pad - B), (0, 0)))

    kernel = functools.partial(
        actor_kernel, act_limit=float(act_limit), c_dim=c, h1=h1, h2=h2,
        off_b2=packed["off_b2"], off_bh=packed["off_bh"],
        off_ls=packed["off_ls"], off_lg=packed["off_lg"])

    out = pl.pallas_call(
        kernel,
        out_shape=jax.ShapeDtypeStruct((b_pad, c + 2), jnp.float32),
        grid_spec=pltpu.PrefetchScalarGridSpec(
            num_scalar_prefetch=0,
            grid=(b_pad // tb,),
            in_specs=[
                pl.BlockSpec((tb, obs_dim), lambda i: (i, 0)),     # obs: batch-tiled
                pl.BlockSpec((obs_dim, h1), lambda i: (0, 0)),     # weights stay resident
                pl.BlockSpec((h1, h2), lambda i: (0, 0)),
                pl.BlockSpec((h2, nheads_pad), lambda i: (0, 0)),  # lane-aligned fused heads
                pl.BlockSpec((1, bias_pad), lambda i: (0, 0)),     # packed biases
                pl.BlockSpec((tb, c + 1), lambda i: (i, 0)),       # fused eps|r noise
            ],
            out_specs=pl.BlockSpec((tb, c + 2), lambda i: (i, 0)),
        ),
        compiler_params=pltpu.CompilerParams(
            dimension_semantics=("parallel",)),  # shards batch across TCs on v7x
    )(obs, packed["w1"], packed["w2"], packed["w_heads"], packed["b_packed"], noise)

    out = out[:B]
    action = out[:, :c + 1]                 # [act_limit*tanh(a) | disc] (torch.cat layout)
    logp_pi = out[:, c + 1] if with_logprob else None
    return action, logp_pi


def init_params(key, obs_dim, hidden_sizes, act_dim):
    """Deterministic synthetic weights (PyTorch nn.Linear shapes, pre-transposed)."""
    cad = act_dim - 1
    sizes = [obs_dim] + list(hidden_sizes)
    keys = jax.random.split(key, 10)
    p = {}
    p["w1"] = 0.1 * jax.random.normal(keys[0], (sizes[0], sizes[1]), jnp.float32)
    p["b1"] = 0.1 * jax.random.normal(keys[1], (1, sizes[1]), jnp.float32)
    p["w2"] = 0.1 * jax.random.normal(keys[2], (sizes[1], sizes[2]), jnp.float32)
    p["b2"] = 0.1 * jax.random.normal(keys[3], (1, sizes[2]), jnp.float32)
    p["w_mu"] = 0.1 * jax.random.normal(keys[4], (sizes[2], cad), jnp.float32)
    p["b_mu"] = 0.1 * jax.random.normal(keys[5], (1, cad), jnp.float32)
    p["w_ls"] = 0.1 * jax.random.normal(keys[6], (sizes[2], cad), jnp.float32)
    p["b_ls"] = 0.1 * jax.random.normal(keys[7], (1, cad), jnp.float32)
    p["w_lg"] = 0.1 * jax.random.normal(keys[8], (sizes[2], 1), jnp.float32)
    p["b_lg"] = 0.1 * jax.random.normal(keys[9], (1, 1), jnp.float32)
    return p


def actor_reference(obs, params, act_limit, eps, r):
    """Pure-JAX reference of the PyTorch forward (same noise)."""
    hp = jax.lax.Precision.HIGHEST
    h = jax.nn.relu(jnp.dot(obs, params["w1"], precision=hp) + params["b1"])
    h = jax.nn.relu(jnp.dot(h, params["w2"], precision=hp) + params["b2"])
    mu = jnp.dot(h, params["w_mu"], precision=hp) + params["b_mu"]
    log_std = jnp.clip(jnp.dot(h, params["w_ls"], precision=hp) + params["b_ls"],
                       LOG_STD_MIN, LOG_STD_MAX)
    std = jnp.exp(log_std)
    logit = jnp.dot(h, params["w_lg"], precision=hp) + params["b_lg"]
    p = jax.nn.sigmoid(logit)
    a = mu + std * eps
    disc = r < p
    logp = jnp.sum(-log_std - 0.5 * eps * eps - HALF_LOG_2PI, axis=-1)
    logp -= jnp.sum(2.0 * (LOG2 - a - jax.nn.softplus(-2.0 * a)), axis=-1)
    logp += jnp.where(disc, jnp.log(jnp.maximum(p, MIN_PROB)),
                      jnp.log(jnp.maximum(1.0 - p, MIN_PROB)))[:, 0]
    action = jnp.concatenate([act_limit * jnp.tanh(a), disc.astype(jnp.float32)], axis=-1)
    return action, logp


if __name__ == "__main__":
    key = jax.random.PRNGKey(0)
    k_param, k_obs, k_sample = jax.random.split(key, 3)

    BATCH = 8
    OBS_DIM = 16
    ACT_DIM = 4          # -> 3 continuous dims + 1 discrete
    HIDDEN = (32, 32)
    ACT_LIMIT = 1.5

    params = init_params(k_param, OBS_DIM, HIDDEN, ACT_DIM)
    packed = pack_params(params)
    obs = jax.random.normal(k_obs, (BATCH, OBS_DIM), jnp.float32)

    # stochastic path
    eps, r = sample_noise(k_sample, BATCH, ACT_DIM - 1, deterministic=False)
    action, logp_pi = actor_forward(obs, packed, ACT_LIMIT, eps, r, with_logprob=True)
    action = jax.block_until_ready(action)
    logp_pi = jax.block_until_ready(logp_pi)

    assert action.shape == (BATCH, ACT_DIM)
    assert logp_pi.shape == (BATCH,)
    assert bool(jnp.all(jnp.isfinite(action))) and bool(jnp.all(jnp.isfinite(logp_pi)))

    ref_action, ref_logp = actor_reference(obs, params, ACT_LIMIT, eps, r)
    assert bool(jnp.allclose(action, ref_action, atol=5e-3, rtol=5e-3)), "action mismatch"
    assert bool(jnp.allclose(logp_pi, ref_logp, atol=5e-3, rtol=5e-3)), "logp mismatch"

    # deterministic path (eps = 0, r = 0.5)
    eps_d, r_d = sample_noise(k_sample, BATCH, ACT_DIM - 1, deterministic=True)
    action_d, logp_pi_d = actor_forward(obs, packed, ACT_LIMIT, eps_d, r_d, with_logprob=True)
    action_d = jax.block_until_ready(action_d)
    assert action_d.shape == (BATCH, ACT_DIM)
    assert bool(jnp.all(jnp.isfinite(action_d)))

    print("KERNEL_OK")
</pallas_src>

<mosaic_0001>
module attributes {stable_mosaic.version = 11 : i64} {
  func.func @actor_kernel(%arg0: i32, %arg1: memref<8x16xf32, #tpu.memory_space<vmem>>, %arg2: memref<16x32xf32, #tpu.memory_space<vmem>>, %arg3: memref<32x32xf32, #tpu.memory_space<vmem>>, %arg4: memref<32x384xf32, #tpu.memory_space<vmem>>, %arg5: memref<1x640xf32, #tpu.memory_space<vmem>>, %arg6: memref<8x4xf32, #tpu.memory_space<vmem>>, %arg7: memref<8x5xf32, #tpu.memory_space<vmem>>) attributes {dimension_semantics = [#tpu.dimension_semantics<parallel>], iteration_bounds = array<i64: 1>, scalar_prefetch = 0 : i64, scratch_operands = 0 : i64, tpu.core_type = #tpu.core_type<tc>, window_params = [{transform_indices = @transform_0, window_bounds = array<i64: 8, 16>}, {pipeline_mode = #tpu.pipeline_mode<synchronous>, transform_indices = @transform_1, window_bounds = array<i64: 16, 32>}, {pipeline_mode = #tpu.pipeline_mode<synchronous>, transform_indices = @transform_2, window_bounds = array<i64: 32, 32>}, {pipeline_mode = #tpu.pipeline_mode<synchronous>, transform_indices = @transform_3, window_bounds = array<i64: 32, 384>}, {pipeline_mode = #tpu.pipeline_mode<synchronous>, transform_indices = @transform_4, window_bounds = array<i64: 1, 640>}, {transform_indices = @transform_5, window_bounds = array<i64: 8, 4>}, {transform_indices = @transform_6, window_bounds = array<i64: 8, 5>}]} {
    %c0 = arith.constant 0 : index
    %c0_0 = arith.constant 0 : index
    %0 = vector.load %arg1[%c0, %c0_0] : memref<8x16xf32, #tpu.memory_space<vmem>>, vector<8x16xf32>
    %c0_1 = arith.constant 0 : index
    %c0_2 = arith.constant 0 : index
    %1 = vector.load %arg5[%c0_1, %c0_2] : memref<1x640xf32, #tpu.memory_space<vmem>>, vector<1x32xf32>
    %c0_3 = arith.constant 0 : index
    %c128 = arith.constant 128 : index
    %2 = vector.load %arg5[%c0_3, %c128] : memref<1x640xf32, #tpu.memory_space<vmem>>, vector<1x32xf32>
    %c0_4 = arith.constant 0 : index
    %c256 = arith.constant 256 : index
    %3 = vector.load %arg5[%c0_4, %c256] : memref<1x640xf32, #tpu.memory_space<vmem>>, vector<1x384xf32>
    %c0_5 = arith.constant 0 : index
    %c0_6 = arith.constant 0 : index
    %4 = vector.load %arg2[%c0_5, %c0_6] : memref<16x32xf32, #tpu.memory_space<vmem>>, vector<16x32xf32>
    %cst = arith.constant dense<0.000000e+00> : vector<8x32xf32>
    %5 = tpu.matmul %0, %4, %cst {dimension_numbers = #tpu.dot_dimension_numbers<[1], [0], [0], [1], [0, 0, 1, 1], [], []>} : vector<8x16xf32>, vector<16x32xf32>, vector<8x32xf32> -> vector<8x32xf32>
    %6 = vector.broadcast %1 : vector<1x32xf32> to vector<8x32xf32>
    %7 = arith.addf %5, %6 : vector<8x32xf32>
    %cst_7 = arith.constant 0.000000e+00 : f32
    %8 = vector.broadcast %cst_7 : f32 to vector<8x32xf32>
    %9 = arith.maximumf %7, %8 : vector<8x32xf32>
    %c0_8 = arith.constant 0 : index
    %c0_9 = arith.constant 0 : index
    %10 = vector.load %arg3[%c0_8, %c0_9] : memref<32x32xf32, #tpu.memory_space<vmem>>, vector<32x32xf32>
    %cst_10 = arith.constant dense<0.000000e+00> : vector<8x32xf32>
    %11 = tpu.matmul %9, %10, %cst_10 {dimension_numbers = #tpu.dot_dimension_numbers<[1], [0], [0], [1], [0, 0, 1, 1], [], []>} : vector<8x32xf32>, vector<32x32xf32>, vector<8x32xf32> -> vector<8x32xf32>
    %12 = vector.broadcast %2 : vector<1x32xf32> to vector<8x32xf32>
    %13 = arith.addf %11, %12 : vector<8x32xf32>
    %cst_11 = arith.constant 0.000000e+00 : f32
    %14 = vector.broadcast %cst_11 : f32 to vector<8x32xf32>
    %15 = arith.maximumf %13, %14 : vector<8x32xf32>
    %c0_12 = arith.constant 0 : index
    %c0_13 = arith.constant 0 : index
    %16 = vector.load %arg4[%c0_12, %c0_13] : memref<32x384xf32, #tpu.memory_space<vmem>>, vector<32x384xf32>
    %cst_14 = arith.constant dense<0.000000e+00> : vector<8x384xf32>
    %17 = tpu.matmul %15, %16, %cst_14 {dimension_numbers = #tpu.dot_dimension_numbers<[1], [0], [0], [1], [0, 0, 1, 1], [], []>} : vector<8x32xf32>, vector<32x384xf32>, vector<8x384xf32> -> vector<8x384xf32>
    %18 = vector.broadcast %3 : vector<1x384xf32> to vector<8x384xf32>
    %19 = arith.addf %17, %18 : vector<8x384xf32>
    %20 = vector.extract_strided_slice %19 {offsets = [0, 0], sizes = [8, 3], strides = [1, 1]} : vector<8x384xf32> to vector<8x3xf32>
    %21 = vector.extract_strided_slice %19 {offsets = [0, 128], sizes = [8, 3], strides = [1, 1]} : vector<8x384xf32> to vector<8x3xf32>
    %cst_15 = arith.constant -2.000000e+01 : f32
    %cst_16 = arith.constant 2.000000e+00 : f32
    %22 = vector.broadcast %cst_15 : f32 to vector<8x3xf32>
    %23 = arith.maximumf %22, %21 : vector<8x3xf32>
    %24 = vector.broadcast %cst_16 : f32 to vector<8x3xf32>
    %25 = arith.minimumf %24, %23 : vector<8x3xf32>
    %26 = math.exp %25 : vector<8x3xf32>
    %27 = vector.extract_strided_slice %19 {offsets = [0, 256], sizes = [8, 1], strides = [1, 1]} : vector<8x384xf32> to vector<8x1xf32>
    %28 = math.absf %27 : vector<8x1xf32>
    %cst_17 = arith.constant 0.000000e+00 : f32
    %29 = vector.broadcast %cst_17 : f32 to vector<8x1xf32>
    %30 = arith.subf %29, %28 : vector<8x1xf32>
    %31 = math.exp %30 : vector<8x1xf32>
    %cst_18 = arith.constant 1.000000e+00 : f32
    %32 = vector.broadcast %cst_18 : f32 to vector<8x1xf32>
    %33 = arith.addf %32, %31 : vector<8x1xf32>
    %cst_19 = arith.constant 1.000000e+00 : f32
    %34 = vector.broadcast %cst_19 : f32 to vector<8x1xf32>
    %35 = arith.divf %34, %33 : vector<8x1xf32>
    %cst_20 = arith.constant 0.000000e+00 : f32
    %36 = vector.broadcast %cst_20 : f32 to vector<8x1xf32>
    %37 = arith.cmpf oge, %27, %36 : vector<8x1xf32>
    %38 = arith.mulf %31, %35 : vector<8x1xf32>
    %39 = arith.select %37, %35, %38 : vector<8x1xi1>, vector<8x1xf32>
    %c0_21 = arith.constant 0 : index
    %c0_22 = arith.constant 0 : index
    %40 = vector.load %arg6[%c0_21, %c0_22] : memref<8x4xf32, #tpu.memory_space<vmem>>, vector<8x3xf32>
    %c0_23 = arith.constant 0 : index
    %c3 = arith.constant 3 : index
    %41 = vector.load %arg6[%c0_23, %c3] : memref<8x4xf32, #tpu.memory_space<vmem>>, vector<8x1xf32>
    %42 = arith.mulf %26, %40 : vector<8x3xf32>
    %43 = arith.addf %20, %42 : vector<8x3xf32>
    %44 = arith.cmpf olt, %41, %39 : vector<8x1xf32>
    %cst_24 = arith.constant -2.000000e+00 : f32
    %45 = vector.broadcast %cst_24 : f32 to vector<8x3xf32>
    %46 = arith.mulf %45, %43 : vector<8x3xf32>
    %cst_25 = arith.constant 2.000000e+01 : f32
    %47 = vector.broadcast %cst_25 : f32 to vector<8x3xf32>
    %48 = arith.cmpf ogt, %46, %47 : vector<8x3xf32>
    %cst_26 = arith.constant 2.000000e+01 : f32
    %49 = vector.broadcast %cst_26 : f32 to vector<8x3xf32>
    %50 = arith.minimumf %46, %49 : vector<8x3xf32>
    %51 = math.exp %50 : vector<8x3xf32>
    %52 = math.log1p %51 : vector<8x3xf32>
    %53 = arith.select %48, %46, %52 : vector<8x3xi1>, vector<8x3xf32>
    %cst_27 = arith.constant 0.000000e+00 : f32
    %54 = vector.broadcast %cst_27 : f32 to vector<8x3xf32>
    %55 = arith.subf %54, %25 : vector<8x3xf32>
    %cst_28 = arith.constant 5.000000e-01 : f32
    %56 = vector.broadcast %cst_28 : f32 to vector<8x3xf32>
    %57 = arith.mulf %56, %40 : vector<8x3xf32>
    %58 = arith.mulf %57, %40 : vector<8x3xf32>
    %59 = arith.subf %55, %58 : vector<8x3xf32>
    %cst_29 = arith.constant 0.918938517 : f32
    %60 = vector.broadcast %cst_29 : f32 to vector<8x3xf32>
    %61 = arith.subf %59, %60 : vector<8x3xf32>
    %cst_30 = arith.constant 0.693147182 : f32
    %62 = vector.broadcast %cst_30 : f32 to vector<8x3xf32>
    %63 = arith.subf %62, %43 : vector<8x3xf32>
    %64 = arith.subf %63, %53 : vector<8x3xf32>
    %cst_31 = arith.constant 2.000000e+00 : f32
    %65 = vector.broadcast %cst_31 : f32 to vector<8x3xf32>
    %66 = arith.mulf %65, %64 : vector<8x3xf32>
    %67 = arith.subf %61, %66 : vector<8x3xf32>
    %cst_32 = arith.constant dense<0.000000e+00> : vector<8xf32>
    %68 = vector.multi_reduction <add>, %67, %cst_32 [1] : vector<8x3xf32> to vector<8xf32>
    %69 = vector.shape_cast %68 : vector<8xf32> to vector<8x1xf32>
    %cst_33 = arith.constant 9.99999996E-13 : f32
    %70 = vector.broadcast %cst_33 : f32 to vector<8x1xf32>
    %71 = arith.maximumf %39, %70 : vector<8x1xf32>
    %72 = math.log %71 : vector<8x1xf32>
    %cst_34 = arith.constant 1.000000e+00 : f32
    %73 = vector.broadcast %cst_34 : f32 to vector<8x1xf32>
    %74 = arith.subf %73, %39 : vector<8x1xf32>
    %cst_35 = arith.constant 9.99999996E-13 : f32
    %75 = vector.broadcast %cst_35 : f32 to vector<8x1xf32>
    %76 = arith.maximumf %74, %75 : vector<8x1xf32>
    %77 = math.log %76 : vector<8x1xf32>
    %78 = arith.select %44, %72, %77 : vector<8x1xi1>, vector<8x1xf32>
    %79 = arith.addf %69, %78 : vector<8x1xf32>
    %80 = math.tanh %43 : vector<8x3xf32>
    %cst_36 = arith.constant 1.500000e+00 : f32
    %81 = vector.broadcast %cst_36 : f32 to vector<8x3xf32>
    %82 = arith.mulf %81, %80 : vector<8x3xf32>
    %c0_37 = arith.constant 0 : index
    %c0_38 = arith.constant 0 : index
    %83 = vector.load %arg7[%c0_37, %c0_38] : memref<8x5xf32, #tpu.memory_space<vmem>>, vector<8x3xf32>
    tpu.vector_store %arg7[%c0_37, %c0_38], %82 {strides = array<i32>} : memref<8x5xf32, #tpu.memory_space<vmem>>, vector<8x3xf32>,
    %84 = arith.extui %44 : vector<8x1xi1> to vector<8x1xi32>
    %85 = arith.sitofp %84 : vector<8x1xi32> to vector<8x1xf32>
    %c0_39 = arith.constant 0 : index
    %c3_40 = arith.constant 3 : index
    %86 = vector.load %arg7[%c0_39, %c3_40] : memref<8x5xf32, #tpu.memory_space<vmem>>, vector<8x1xf32>
    tpu.vector_store %arg7[%c0_39, %c3_40], %85 {strides = array<i32>} : memref<8x5xf32, #tpu.memory_space<vmem>>, vector<8x1xf32>,
    %c0_41 = arith.constant 0 : index
    %c4 = arith.constant 4 : index
    %87 = vector.load %arg7[%c0_41, %c4] : memref<8x5xf32, #tpu.memory_space<vmem>>, vector<8x1xf32>
    tpu.vector_store %arg7[%c0_41, %c4], %79 {strides = array<i32>} : memref<8x5xf32, #tpu.memory_space<vmem>>, vector<8x1xf32>,
    return
  }
  func.func @transform_0(%arg0: i32) -> (i32, i32) {
    %c0_i32 = arith.constant 0 : i32
    %c0_i32_0 = arith.constant 0 : i32
    return %arg0, %c0_i32 : i32, i32
  }
  func.func @transform_1(%arg0: i32) -> (i32, i32) {
    %c0_i32 = arith.constant 0 : i32
    %c0_i32_0 = arith.constant 0 : i32
    %c0_i32_1 = arith.constant 0 : i32
    return %c0_i32, %c0_i32_0 : i32, i32
  }
  func.func @transform_2(%arg0: i32) -> (i32, i32) {
    %c0_i32 = arith.constant 0 : i32
    %c0_i32_0 = arith.constant 0 : i32
    %c0_i32_1 = arith.constant 0 : i32
    return %c0_i32, %c0_i32_0 : i32, i32
  }
  func.func @transform_3(%arg0: i32) -> (i32, i32) {
    %c0_i32 = arith.constant 0 : i32
    %c0_i32_0 = arith.constant 0 : i32
    %c0_i32_1 = arith.constant 0 : i32
    return %c0_i32, %c0_i32_0 : i32, i32
  }
  func.func @transform_4(%arg0: i32) -> (i32, i32) {
    %c0_i32 = arith.constant 0 : i32
    %c0_i32_0 = arith.constant 0 : i32
    %c0_i32_1 = arith.constant 0 : i32
    return %c0_i32, %c0_i32_0 : i32, i32
  }
  func.func @transform_5(%arg0: i32) -> (i32, i32) {
    %c0_i32 = arith.constant 0 : i32
    %c0_i32_0 = arith.constant 0 : i32
    return %arg0, %c0_i32 : i32, i32
  }
  func.func @transform_6(%arg0: i32) -> (i32, i32) {
    %c0_i32 = arith.constant 0 : i32
    %c0_i32_0 = arith.constant 0 : i32
    return %arg0, %c0_i32 : i32, i32
  }
}

</mosaic_0001>

<llo_original>
// kernel: tpu_custom_call.1
$region0: #{tpu_custom_call.1}
  #allocation0 [shape = 'u32[]', space=smem, size = 0x4, offset = 0x4, fixed_abs, tag = 'smem constant byte address 0x4 - core index']
  #allocation1 [shape = 'u32[144,128]{1,0:T(1,128)}', space=vmem, size = 0x12000, scoped, tag = 'internal scratch']
  %s0 = inlined_call_operand.vmem [shape: f32[8,16], index: 0, kind: input, shape index: {}]
  %s1 = inlined_call_operand.hbm [shape: f32[16,32], index: 1, kind: input, shape index: {}]
  %s2 = inlined_call_operand.hbm [shape: f32[32,32], index: 2, kind: input, shape index: {}]
  %s3 = inlined_call_operand.hbm [shape: f32[32,384], index: 3, kind: input, shape index: {}]
  %s4 = inlined_call_operand.vmem [shape: f32[1,640], index: 4, kind: input, shape index: {}]
  %s5 = inlined_call_operand.vmem [shape: f32[8,4], index: 5, kind: input, shape index: {}]
  %s6 = inlined_call_operand.hbm [shape: f32[8,5], index: 6, kind: output, shape index: {}]
  %s7 = sld [smem:[#allocation0]]
  $region46: #{tpu_custom_call.1} parent=0
    _
  %s9 = ssub.s32 1, %s7
  %s10 = scalar_select 0, %s9, %s7
  $region1: #{tpu_custom_call.1} parent=0
    #allocation2 [shape = 'u8[8192]{0}', space=vmem, size = 0x2000, scoped, tag = 'input window, operand 1, single buffered']
    #allocation3 [shape = 's32[1]{0}', space=sflag, size = 0x4, scoped, tag = 'scoped memory for tpu_custom_call.1']
    #allocation4 [shape = 's32[1]{0}', space=sflag, size = 0x4, scoped, tag = 'scoped memory for tpu_custom_call.1']
    #allocation5 [shape = 'u8[16384]{0}', space=vmem, size = 0x4000, scoped, tag = 'input window, operand 2, single buffered']
    #allocation6 [shape = 's32[1]{0}', space=sflag, size = 0x4, scoped, tag = 'scoped memory for tpu_custom_call.1']
    #allocation7 [shape = 'u8[49152]{0}', space=vmem, size = 0xc000, scoped, tag = 'input window, operand 3, single buffered']
    #allocation8 [shape = 'u8[4096]{0}', space=vmem, size = 0x1000, scoped, tag = 'output window, operand 0, single buffered']
    %11 = vsyncpa [#allocation3], 0
    %12 = vsyncpa [#allocation6], 0
    %13 = vsyncpa [#allocation4], 0
    // Predicated region
    $region2: #{tpu_custom_call.1} parent=1 // pred_check
      _
    $region3: #{tpu_custom_call.1} parent=1 // pred_check_branch
      %15 = sbr.rel (0) target = $region5
    $region4: #{tpu_custom_call.1} parent=1 // pred_region
      _
    $region5: #{tpu_custom_call.1} parent=1 // pred_fallthru
      _
    // Predicated region
    $region6: #{tpu_custom_call.1} parent=1 // pred_check
      _
    $region7: #{tpu_custom_call.1} parent=1 // pred_check_branch
      %17 = sbr.rel (0) target = $region9
    $region8: #{tpu_custom_call.1} parent=1 // pred_region
      %s19 = ssub.s32 256, 256
      %20 = vsyncadd [#allocation3], %s19
      %s21 = sshll.u32 [#allocation2], 4
      %s22 = int_to_ptr.vmem [resolvable:$true] %s21
      %27 = dma.hbm_to_vmem [thread:$0]  %s1, 256, %s22, [#allocation3], 128, 128, 8
    $region9: #{tpu_custom_call.1} parent=1 // pred_fallthru
      _
    // Predicated region
    $region10: #{tpu_custom_call.1} parent=1 // pred_check
      _
    $region11: #{tpu_custom_call.1} parent=1 // pred_check_branch
      %29 = sbr.rel (0) target = $region13
    $region12: #{tpu_custom_call.1} parent=1 // pred_region
      %s31 = ssub.s32 512, 512
      %32 = vsyncadd [#allocation6], %s31
      %s33 = sshll.u32 [#allocation5], 4
      %s34 = int_to_ptr.vmem [resolvable:$true] %s33
      %39 = dma.hbm_to_vmem [thread:$0]  %s2, 512, %s34, [#allocation6], 128, 128, 8
    $region13: #{tpu_custom_call.1} parent=1 // pred_fallthru
      _
    // Predicated region
    $region14: #{tpu_custom_call.1} parent=1 // pred_check
      _
    $region15: #{tpu_custom_call.1} parent=1 // pred_check_branch
      %41 = sbr.rel (0) target = $region17
    $region16: #{tpu_custom_call.1} parent=1 // pred_region
      %s43 = ssub.s32 1536, 1536
      %44 = vsyncadd [#allocation6], %s43
      %s45 = sshll.u32 [#allocation7], 4
      %s46 = int_to_ptr.vmem [resolvable:$true] %s45
      %51 = dma.hbm_to_vmem [thread:$0]  %s3, 1536, %s46, [#allocation6], 384, 384, 24
    $region17: #{tpu_custom_call.1} parent=1 // pred_fallthru
      _
    // Predicated region
    $region18: #{tpu_custom_call.1} parent=1 // pred_check
      _
    $region19: #{tpu_custom_call.1} parent=1 // pred_check_branch
      %53 = sbr.rel (0) target = $region21
    $region20: #{tpu_custom_call.1} parent=1 // pred_region
      _
    $region21: #{tpu_custom_call.1} parent=1 // pred_fallthru
      _
    // Predicated region
    $region22: #{tpu_custom_call.1} parent=1 // pred_check
      _
    $region23: #{tpu_custom_call.1} parent=1 // pred_check_branch
      %55 = sbr.rel (0) target = $region25
    $region24: #{tpu_custom_call.1} parent=1 // pred_region
      _
    $region25: #{tpu_custom_call.1} parent=1 // pred_fallthru
      _
    // Predicated region
    $region26: #{tpu_custom_call.1} parent=1 // pred_check
      _
    $region27: #{tpu_custom_call.1} parent=1 // pred_check_branch
      %57 = sbr.rel (0) target = $region29
    $region28: #{tpu_custom_call.1} parent=1 // pred_region
      %58 = dma.done [#allocation3], 256
    $region29: #{tpu_custom_call.1} parent=1 // pred_fallthru
      _
    // Predicated region
    $region30: #{tpu_custom_call.1} parent=1 // pred_check
      _
    $region31: #{tpu_custom_call.1} parent=1 // pred_check_branch
      %60 = sbr.rel (0) target = $region33
    $region32: #{tpu_custom_call.1} parent=1 // pred_region
      %61 = dma.done [#allocation6], 512
    $region33: #{tpu_custom_call.1} parent=1 // pred_fallthru
      _
    // Predicated region
    $region34: #{tpu_custom_call.1} parent=1 // pred_check
      _
    $region35: #{tpu_custom_call.1} parent=1 // pred_check_branch
      %63 = sbr.rel (0) target = $region37
    $region36: #{tpu_custom_call.1} parent=1 // pred_region
      %64 = dma.done [#allocation6], 1536
    $region37: #{tpu_custom_call.1} parent=1 // pred_fallthru
      _
    %v65 = vld [vmem:[%s0] sm:$0xff]
    %v66 = vld [vmem:[%s4] sm:$0x1]
    %v67 = vld [vmem:[%s4 + $0x1] sm:$0x1]
    %v68 = vld [vmem:[%s4 + $0x2] sm:$0x7]
    %v69 = vld [vmem:[#allocation2] sm:$0xff]
    %v70 = vld [vmem:[#allocation2 + $0x8] sm:$0xff]
    %v72 = vlaneseq
    %v73 = vshrl.u32 %v72, 7
    %v74 = vsub.s32 0, %v73
    %v75 = vrot.slane %v66, %v74
    %vm77 = vcmask 130048
    %v79 = vsel %vm77, %v65, 0
    %81 = vmatprep.subr.mxu0 0.0
    %82 = vmatpush1.msra.mxu0 %v69
    %83 = vmatprep.subr.mxu0 0.0
    %84 = vmatpush1.msra.mxu0 %v70
    %85 = vmatprep.subr.mxu0 0.0
    %86 = vmatpush1.msra.mxu0 0.0
    %87 = vmatprep.subr.mxu0 0.0
    %88 = vmatpush1.msra.mxu0 0.0
    %89 = vmatprep.subr.mxu0 0.0
    %90 = vmatpush1.msra.mxu0 0.0
    %91 = vmatprep.subr.mxu0 0.0
    %92 = vmatpush1.msra.mxu0 0.0
    %93 = vmatprep.subr.mxu0 0.0
    %94 = vmatpush1.msra.mxu0 0.0
    %95 = vmatprep.subr.mxu0 0.0
    %96 = vmatpush1.msra.mxu0 0.0
    %97 = vmatprep.subr.mxu0 0.0
    %98 = vmatpush1.msra.mxu0 0.0
    %99 = vmatprep.subr.mxu0 0.0
    %100 = vmatpush1.msra.mxu0 0.0
    %101 = vmatprep.subr.mxu0 0.0
    %102 = vmatpush1.msra.mxu0 0.0
    %103 = vmatprep.subr.mxu0 0.0
    %104 = vmatpush1.msra.mxu0 0.0
    %105 = vmatprep.subr.mxu0 0.0
    %106 = vmatpush1.msra.mxu0 0.0
    %107 = vmatprep.subr.mxu0 0.0
    %108 = vmatpush1.msra.mxu0 0.0
    %109 = vmatprep.subr.mxu0 0.0
    %110 = vmatpush1.msra.mxu0 0.0
    %111 = vmatprep.subr.mxu0 0.0
    %112 = vmatpush1.msra.mxu0 0.0
    %113 = vmatprep.subr.mxu0 0.0
    %114 = vmatpush1.msra.mxu0 0.0
    %115 = vmatprep.subr.mxu0 0.0
    %116 = vmatpush1.msra.mxu0 0.0
    %117 = vmatprep.subr.mxu0 0.0
    %118 = vmatpush1.msra.mxu0 0.0
    %119 = vmatprep.subr.mxu0 0.0
    %120 = vmatpush1.msra.mxu0 0.0
    %121 = vmatprep.subr.mxu0 0.0
    %122 = vmatpush1.msra.mxu0 0.0
    %123 = vmatprep.subr.mxu0 0.0
    %124 = vmatpush1.msra.mxu0 0.0
    %125 = vmatprep.subr.mxu0 0.0
    %126 = vmatpush1.msra.mxu0 0.0
    %127 = vmatprep.subr.mxu0 0.0
    %128 = vmatpush1.msra.mxu0 0.0
    %129 = vmatprep.subr.mxu0 0.0
    %130 = vmatpush1.msra.mxu0 0.0
    %131 = vmatprep.subr.mxu0 0.0
    %132 = vmatpush1.msra.mxu0 0.0
    %133 = vmatprep.subr.mxu0 0.0
    %134 = vmatpush1.msra.mxu0 0.0
    %135 = vmatprep.subr.mxu0 0.0
    %136 = vmatpush1.msra.mxu0 0.0
    %137 = vmatprep.subr.mxu0 0.0
    %138 = vmatpush1.msra.mxu0 0.0
    %139 = vmatprep.subr.mxu0 0.0
    %140 = vmatpush1.msra.mxu0 0.0
    %141 = vmatprep.subr.mxu0 0.0
    %142 = vmatpush1.msra.mxu0 0.0
    %143 = vmatprep.subr.mxu0 0.0
    %144 = vmatpush1.msra.mxu0 0.0
    %145 = vmatprep.mubr.f32.mxu0 0.0
    %146 = vmatmul.mubr.f32.gmra.mrb[0].mxu0 %v79
    %v147 = vpop.f32.mrb[0].mxu0
    %v148 = vadd.f32 %v75, %v147
    %v149 = vpop.f32.mrb[0].mxu0
    %150 = vdwg.mxu0
    %v151 = vmax.f32 %v148, 0.0
    %v152 = vld [vmem:[#allocation5] sm:$0xff]
    %v153 = vld [vmem:[#allocation5 + $0x8] sm:$0xff]
    %v154 = vld [vmem:[#allocation5 + $0x10] sm:$0xff]
    %v155 = vld [vmem:[#allocation5 + $0x18] sm:$0xff]
    %v157 = vlaneseq
    %v158 = vshrl.u32 %v157, 7
    %v159 = vsub.s32 0, %v158
    %v160 = vrot.slane %v67, %v159
    %vm162 = vcmask 261120
    %v164 = vsel %vm162, %v151, 0
    %166 = vmatprep.subr.mxu0 0.0
    %167 = vmatpush1.msra.mxu0 %v152
    %168 = vmatprep.subr.mxu0 0.0
    %169 = vmatpush1.msra.mxu0 %v153
    %170 = vmatprep.subr.mxu0 0.0
    %171 = vmatpush1.msra.mxu0 %v154
    %172 = vmatprep.subr.mxu0 0.0
    %173 = vmatpush1.msra.mxu0 %v155
    %174 = vmatprep.subr.mxu0 0.0
    %175 = vmatpush1.msra.mxu0 0.0
    %176 = vmatprep.subr.mxu0 0.0
    %177 = vmatpush1.msra.mxu0 0.0
    %178 = vmatprep.subr.mxu0 0.0
    %179 = vmatpush1.msra.mxu0 0.0
    %180 = vmatprep.subr.mxu0 0.0
    %181 = vmatpush1.msra.mxu0 0.0
    %182 = vmatprep.subr.mxu0 0.0
    %183 = vmatpush1.msra.mxu0 0.0
    %184 = vmatprep.subr.mxu0 0.0
    %185 = vmatpush1.msra.mxu0 0.0
    %186 = vmatprep.subr.mxu0 0.0
    %187 = vmatpush1.msra.mxu0 0.0
    %188 = vmatprep.subr.mxu0 0.0
    %189 = vmatpush1.msra.mxu0 0.0
    %190 = vmatprep.subr.mxu0 0.0
    %191 = vmatpush1.msra.mxu0 0.0
    %192 = vmatprep.subr.mxu0 0.0
    %193 = vmatpush1.msra.mxu0 0.0
    %194 = vmatprep.subr.mxu0 0.0
    %195 = vmatpush1.msra.mxu0 0.0
    %196 = vmatprep.subr.mxu0 0.0
    %197 = vmatpush1.msra.mxu0 0.0
    %198 = vmatprep.subr.mxu0 0.0
    %199 = vmatpush1.msra.mxu0 0.0
    %200 = vmatprep.subr.mxu0 0.0
    %201 = vmatpush1.msra.mxu0 0.0
    %202 = vmatprep.subr.mxu0 0.0
    %203 = vmatpush1.msra.mxu0 0.0
    %204 = vmatprep.subr.mxu0 0.0
    %205 = vmatpush1.msra.mxu0 0.0
    %206 = vmatprep.subr.mxu0 0.0
    %207 = vmatpush1.msra.mxu0 0.0
    %208 = vmatprep.subr.mxu0 0.0
    %209 = vmatpush1.msra.mxu0 0.0
    %210 = vmatprep.subr.mxu0 0.0
    %211 = vmatpush1.msra.mxu0 0.0
    %212 = vmatprep.subr.mxu0 0.0
    %213 = vmatpush1.msra.mxu0 0.0
    %214 = vmatprep.subr.mxu0 0.0
    %215 = vmatpush1.msra.mxu0 0.0
    %216 = vmatprep.subr.mxu0 0.0
    %217 = vmatpush1.msra.mxu0 0.0
    %218 = vmatprep.subr.mxu0 0.0
    %219 = vmatpush1.msra.mxu0 0.0
    %220 = vmatprep.subr.mxu0 0.0
    %221 = vmatpush1.msra.mxu0 0.0
    %222 = vmatprep.subr.mxu0 0.0
    %223 = vmatpush1.msra.mxu0 0.0
    %224 = vmatprep.subr.mxu0 0.0
    %225 = vmatpush1.msra.mxu0 0.0
    %226 = vmatprep.subr.mxu0 0.0
    %227 = vmatpush1.msra.mxu0 0.0
    %228 = vmatprep.subr.mxu0 0.0
    %229 = vmatpush1.msra.mxu0 0.0
    %230 = vmatprep.mubr.f32.mxu0 0.0
    %231 = vmatmul.mubr.f32.gmra.mrb[0].mxu0 %v164
    %v232 = vpop.f32.mrb[0].mxu0
    %v233 = vadd.f32 %v160, %v232
    %v234 = vpop.f32.mrb[0].mxu0
    %235 = vdwg.mxu0
    %v236 = vmax.f32 %v233, 0.0
    %v237 = vld [vmem:[#allocation7] sm:$0xff]
    %v238 = vld [vmem:[#allocation7 + $0x8] sm:$0xff]
    %v239 = vld [vmem:[#allocation7 + $0x10] sm:$0xff]
    %v240 = vld [vmem:[#allocation7 + $0x18] sm:$0xff]
    %v241 = vld [vmem:[#allocation7 + $0x20] sm:$0xff]
    %v242 = vld [vmem:[#allocation7 + $0x28] sm:$0xff]
    %v243 = vld [vmem:[#allocation7 + $0x30] sm:$0xff]
    %v244 = vld [vmem:[#allocation7 + $0x38] sm:$0xff]
    %v245 = vld [vmem:[#allocation7 + $0x40] sm:$0xff]
    %v246 = vld [vmem:[#allocation7 + $0x48] sm:$0xff]
    %v247 = vld [vmem:[#allocation7 + $0x50] sm:$0xff]
    %v248 = vld [vmem:[#allocation7 + $0x58] sm:$0xff]
    %v250 = vlaneseq
    %v251 = vshrl.u32 %v250, 7
    %v252 = vsub.s32 0, %v251
    %v253 = vrot.slane %v68, %v252
    %v254 = vlaneseq
    %v255 = vshrl.u32 %v254, 7
    %v256 = vsub.s32 1, %v255
    %v257 = vrot.slane %v68, %v256
    %v258 = vlaneseq
    %v259 = vshrl.u32 %v258, 7
    %v260 = vsub.s32 2, %v259
    %v261 = vrot.slane %v68, %v260
    %v266 = vsel %vm162, %v236, 0
    %268 = vmatprep.subr.mxu0 %v238
    %269 = vmatpush1.msra.mxu0 %v237
    %270 = vmatprep.subr.mxu0 %v241
    %271 = vmatpush1.msra.mxu0 %v240
    %272 = vmatprep.subr.mxu0 %v244
    %273 = vmatpush1.msra.mxu0 %v243
    %274 = vmatprep.subr.mxu0 %v247
    %275 = vmatpush1.msra.mxu0 %v246
    %276 = vmatprep.subr.mxu0 0.0
    %277 = vmatpush1.msra.mxu0 0.0
    %278 = vmatprep.subr.mxu0 0.0
    %279 = vmatpush1.msra.mxu0 0.0
    %280 = vmatprep.subr.mxu0 0.0
    %281 = vmatpush1.msra.mxu0 0.0
    %282 = vmatprep.subr.mxu0 0.0
    %283 = vmatpush1.msra.mxu0 0.0
    %284 = vmatprep.subr.mxu0 0.0
    %285 = vmatpush1.msra.mxu0 0.0
    %286 = vmatprep.subr.mxu0 0.0
    %287 = vmatpush1.msra.mxu0 0.0
    %288 = vmatprep.subr.mxu0 0.0
    %289 = vmatpush1.msra.mxu0 0.0
    %290 = vmatprep.subr.mxu0 0.0
    %291 = vmatpush1.msra.mxu0 0.0
    %292 = vmatprep.subr.mxu0 0.0
    %293 = vmatpush1.msra.mxu0 0.0
    %294 = vmatprep.subr.mxu0 0.0
    %295 = vmatpush1.msra.mxu0 0.0
    %296 = vmatprep.subr.mxu0 0.0
    %297 = vmatpush1.msra.mxu0 0.0
    %298 = vmatprep.subr.mxu0 0.0
    %299 = vmatpush1.msra.mxu0 0.0
    %300 = vmatprep.subr.mxu0 0.0
    %301 = vmatpush1.msra.mxu0 0.0
    %302 = vmatprep.subr.mxu0 0.0
    %303 = vmatpush1.msra.mxu0 0.0
    %304 = vmatprep.subr.mxu0 0.0
    %305 = vmatpush1.msra.mxu0 0.0
    %306 = vmatprep.subr.mxu0 0.0
    %307 = vmatpush1.msra.mxu0 0.0
    %308 = vmatprep.subr.mxu0 0.0
    %309 = vmatpush1.msra.mxu0 0.0
    %310 = vmatprep.subr.mxu0 0.0
    %311 = vmatpush1.msra.mxu0 0.0
    %312 = vmatprep.subr.mxu0 0.0
    %313 = vmatpush1.msra.mxu0 0.0
    %314 = vmatprep.subr.mxu0 0.0
    %315 = vmatpush1.msra.mxu0 0.0
    %316 = vmatprep.subr.mxu0 0.0
    %317 = vmatpush1.msra.mxu0 0.0
    %318 = vmatprep.subr.mxu0 0.0
    %319 = vmatpush1.msra.mxu0 0.0
    %320 = vmatprep.subr.mxu0 0.0
    %321 = vmatpush1.msra.mxu0 0.0
    %322 = vmatprep.subr.mxu0 0.0
    %323 = vmatpush1.msra.mxu0 0.0
    %324 = vmatprep.subr.mxu0 0.0
    %325 = vmatpush1.msra.mxu0 0.0
    %326 = vmatprep.subr.mxu0 0.0
    %327 = vmatpush1.msra.mxu0 0.0
    %328 = vmatprep.subr.mxu0 0.0
    %329 = vmatpush1.msra.mxu0 0.0
    %330 = vmatprep.subr.mxu0 0.0
    %331 = vmatpush1.msra.mxu0 0.0
    %332 = vmatprep.mubr.f32.mxu0 0.0
    %333 = vmatmul.mubr.f32.gmra.mrb[0].mxu0 %v266
    %v334 = vpop.f32.mrb[0].mxu0
    %v335 = vadd.f32 %v253, %v334
    %v336 = vpop.f32.mrb[0].mxu0
    %v337 = vadd.f32 %v257, %v336
    %338 = vdwg.mxu0
    %339 = vmatprep.subr.mxu0 0.0
    %340 = vmatpush1.msra.mxu0 %v239
    %341 = vmatprep.subr.mxu0 0.0
    %342 = vmatpush1.msra.mxu0 %v242
    %343 = vmatprep.subr.mxu0 0.0
    %344 = vmatpush1.msra.mxu0 %v245
    %345 = vmatprep.subr.mxu0 0.0
    %346 = vmatpush1.msra.mxu0 %v248
    %347 = vmatprep.subr.mxu0 0.0
    %348 = vmatpush1.msra.mxu0 0.0
    %349 = vmatprep.subr.mxu0 0.0
    %350 = vmatpush1.msra.mxu0 0.0
    %351 = vmatprep.subr.mxu0 0.0
    %352 = vmatpush1.msra.mxu0 0.0
    %353 = vmatprep.subr.mxu0 0.0
    %354 = vmatpush1.msra.mxu0 0.0
    %355 = vmatprep.subr.mxu0 0.0
    %356 = vmatpush1.msra.mxu0 0.0
    %357 = vmatprep.subr.mxu0 0.0
    %358 = vmatpush1.msra.mxu0 0.0
    %359 = vmatprep.subr.mxu0 0.0
    %360 = vmatpush1.msra.mxu0 0.0
    %361 = vmatprep.subr.mxu0 0.0
    %362 = vmatpush1.msra.mxu0 0.0
    %363 = vmatprep.subr.mxu0 0.0
    %364 = vmatpush1.msra.mxu0 0.0
    %365 = vmatprep.subr.mxu0 0.0
    %366 = vmatpush1.msra.mxu0 0.0
    %367 = vmatprep.subr.mxu0 0.0
    %368 = vmatpush1.msra.mxu0 0.0
    %369 = vmatprep.subr.mxu0 0.0
    %370 = vmatpush1.msra.mxu0 0.0
    %371 = vmatprep.subr.mxu0 0.0
    %372 = vmatpush1.msra.mxu0 0.0
    %373 = vmatprep.subr.mxu0 0.0
    %374 = vmatpush1.msra.mxu0 0.0
    %375 = vmatprep.subr.mxu0 0.0
    %376 = vmatpush1.msra.mxu0 0.0
    %377 = vmatprep.subr.mxu0 0.0
    %378 = vmatpush1.msra.mxu0 0.0
    %379 = vmatprep.subr.mxu0 0.0
    %380 = vmatpush1.msra.mxu0 0.0
    %381 = vmatprep.subr.mxu0 0.0
    %382 = vmatpush1.msra.mxu0 0.0
    %383 = vmatprep.subr.mxu0 0.0
    %384 = vmatpush1.msra.mxu0 0.0
    %385 = vmatprep.subr.mxu0 0.0
    %386 = vmatpush1.msra.mxu0 0.0
    %387 = vmatprep.subr.mxu0 0.0
    %388 = vmatpush1.msra.mxu0 0.0
    %389 = vmatprep.subr.mxu0 0.0
    %390 = vmatpush1.msra.mxu0 0.0
    %391 = vmatprep.subr.mxu0 0.0
    %392 = vmatpush1.msra.mxu0 0.0
    %393 = vmatprep.subr.mxu0 0.0
    %394 = vmatpush1.msra.mxu0 0.0
    %395 = vmatprep.subr.mxu0 0.0
    %396 = vmatpush1.msra.mxu0 0.0
    %397 = vmatprep.subr.mxu0 0.0
    %398 = vmatpush1.msra.mxu0 0.0
    %399 = vmatprep.subr.mxu0 0.0
    %400 = vmatpush1.msra.mxu0 0.0
    %401 = vmatprep.subr.mxu0 0.0
    %402 = vmatpush1.msra.mxu0 0.0
    %403 = vmatprep.mubr.f32.mxu0 0.0
    %404 = vmatmul.mubr.f32.gmra.mrb[0].mxu0 %v266
    %v405 = vpop.f32.mrb[0].mxu0
    %v406 = vadd.f32 %v261, %v405
    %v407 = vpop.f32.mrb[0].mxu0
    %408 = vdwg.mxu0
    %v409 = vmax.f32 %v337, -20.0
    %v410 = vmin.f32 %v409, 2.0
    %v411 = vmul.f32 %v410, 1.442695
    %v412 = vpow.pop %v411
    %v413 = vand.u32 2147483647, %v406
    %v414 = vsub.f32 0.0, %v413
    %v415 = vmul.f32 %v414, 1.442695
    %v416 = vpow.pop %v415
    %v417 = vadd.f32 %v416, 1.0
    %v418 = vrcp.pop %v417
    %v419 = vmul.f32 1.0, %v418
    %vm420 = vcmp.ge.f32.partialorder %v406, 0.0
    %v421 = vmul.f32 %v416, %v419
    %v422 = vsel %vm420, %v419, %v421
    %v423 = vld [vmem:[%s5] sm:$0xff]
    %v424 = vmul.f32 %v412, %v423
    %v425 = vadd.f32 %v335, %v424
    %427 = vrot.lane.b32.xlu0 %v422, 3
    %v428 = vpop.permute.xlu0 %427
    %vm430 = vcmp.lt.f32.partialorder %v423, %v428
    %v431 = vmul.f32 %v425, -2.0
    %vm432 = vcmp.gt.f32.partialorder %v431, 20.0
    %v433 = vmin.f32 %v431, 20.0
    %v434 = vmul.f32 %v433, 1.442695
    %v435 = vpow.pop %v434
    %v436 = vadd.f32 %v435, 1.0
    %v437 = vlog2.pop %v436
    %v438 = vmul.f32 %v437, 0.6931472
    %v439 = vmul.f32 -0.5, %v435
    %v440 = vadd.f32 %v439, 1.0
    %v441 = vmul.f32 %v440, %v435
    %v442 = vand.u32 2147483647, %v435
    %vm443 = vcmp.lt.f32.partialorder %v442, 0.0004427343
    %v444 = vsel %vm443, %v441, %v438
    %v445 = vsel %vm432, %v431, %v444
    %v446 = vsub.f32 0.0, %v410
    %v447 = vmul.f32 %v423, 0.5
    %v448 = vmul.f32 %v447, %v423
    %v449 = vsub.f32 %v446, %v448
    %v450 = vsub.f32 %v449, 0.9189385
    %v451 = vsub.f32 0.6931472, %v425
    %v452 = vsub.f32 %v451, %v445
    %v453 = vmul.f32 %v452, 2.0
    %v454 = vsub.f32 %v450, %v453
    %vm455 = vcmask 23552
    %v456 = vsel %vm455, %v454, 0.0
    %457 = vadd.xlane.f32.xlu0 %v456
    %v458 = vpop.xlane.xlu0 %457
    %v459 = vmax.f32 %v422, 1e-12
    %v460 = vlog2.pop %v459
    %v461 = vmul.f32 %v460, 0.6931472
    %v462 = vsub.f32 1.0, %v422
    %v463 = vmax.f32 %v462, 1e-12
    %v464 = vlog2.pop %v463
    %v465 = vmul.f32 %v464, 0.6931472
    %467 = vrot.lane.b32.xlu0 %v461, 3
    %v468 = vpop.permute.xlu0 %467
    %471 = vrot.lane.b32.xlu0 %v465, 3
    %v472 = vpop.permute.xlu0 %471
    %v474 = vsel %vm430, %v468, %v472
    %v475 = vadd.f32 %v458, %v474
    %v476 = vtanh.pop %v425
    %v477 = vmul.f32 %v476, 1.5
    %478 = vst.msk [vmem:[#allocation8] sm:$0xff] %vm455, %v477
    %v479 = vsel %vm430, 1, 0
    %v480 = vcvt.s32.f32 %v479
    %vm481 = vcmask 31768
    %482 = vst.msk [vmem:[#allocation8] sm:$0xff] %vm481, %v480
    %484 = vrot.lane.b32.xlu0 %v475, 1
    %v485 = vpop.permute.xlu0 %484
    %vm487 = vcmask 39968
    %488 = vst.msk [vmem:[#allocation8] sm:$0xff] %vm487, %v485
    // Predicated region
    $region38: #{tpu_custom_call.1} parent=1 // pred_check
      _
    $region39: #{tpu_custom_call.1} parent=1 // pred_check_branch
      %490 = sbr.rel (0) target = $region41
    $region40: #{tpu_custom_call.1} parent=1 // pred_region
      %s492 = ssub.s32 128, 128
      %493 = vsyncadd [#allocation4], %s492
      %s495 = sshll.u32 [#allocation8], 4
      %s496 = int_to_ptr.vmem [resolvable:$true] %s495
      %498 = dma.vmem_to_hbm [thread:$0]  %s496, 128, %s6, [#allocation4]
    $region41: #{tpu_custom_call.1} parent=1 // pred_fallthru
      _
    // Predicated region
    $region42: #{tpu_custom_call.1} parent=1 // pred_check
      _
    $region43: #{tpu_custom_call.1} parent=1 // pred_check_branch
      %500 = sbr.rel (0) target = $region45
    $region44: #{tpu_custom_call.1} parent=1 // pred_region
      %501 = dma.done [#allocation4], 128
    $region45: #{tpu_custom_call.1} parent=1 // pred_fallthru
      _
    %502 = vsyncpa [#allocation3], 1
    %503 = vsyncpa [#allocation6], 1
    %504 = vsyncpa [#allocation4], 1

</llo_original>
